<compile_context>
chip_gen: v5e
topology: v5e:2x2
jax: 0.10.0
libtpu: 0.0.40
codegen_flags: <defaults>
</compile_context>

<pallas_src>
import functools

import jax
import jax.numpy as jnp
from jax.experimental import pallas as pl
from jax.experimental.pallas import tpu as pltpu

SIZE1 = 10        # conv1 out channels
SIZE2 = 10        # conv2 out channels
SIZE4 = 100       # fc1 out features
NUM_CLASSES = 2


# ---------------------------------------------------------------------------
# Fused kernel: one batch tile per grid step.
#   x_ref  : (4*tn*pix, C)  rows = (pool-offset g, local batch n, pixel p)
#   w1_ref : (C, SIZE1)         b1_ref : (1, SIZE1)
#   w2_ref : (SIZE1, SIZE2)     b2_ref : (1, SIZE2)
#   w3_ref : (SIZE2*pix, SIZE4) rows in PyTorch channel-major order (c*pix + p)
#   b3_ref : (1, SIZE4)
#   w4_ref : (SIZE4, 2)         b4_ref : (1, 2)
#   o_ref  : (tn, 2)
#   flat_scr: VMEM (tn, SIZE2*pix) scratch for the flattened activations
# ---------------------------------------------------------------------------
def cnn2d_kernel(x_ref, w1_ref, b1_ref, w2_ref, b2_ref,
                 w3_ref, b3_ref, w4_ref, b4_ref, o_ref, flat_scr, *, pix):
    tn = o_ref.shape[0]
    n_ch2 = w2_ref.shape[1]
    npx = tn * pix

    # conv1 (1x1, pointwise) + bias + relu over all (offset, batch, pixel)
    # rows at once: a single (4*tn*pix, C) @ (C, SIZE1) matmul.
    h1 = jnp.maximum(
        jnp.dot(x_ref[...], w1_ref[...], preferred_element_type=jnp.float32)
        + b1_ref[...], 0.0)                                   # (4*npx, SIZE1)

    # maxpool 2x2 == max over the 4 pool-offset row blocks; each block is
    # npx = tn*pix rows (multiple of 8 -> aligned whole-vreg loads + vmax).
    pooled = h1[0:npx, :]
    for g in range(1, 4):
        pooled = jnp.maximum(pooled, h1[g * npx:(g + 1) * npx, :])  # (npx, SIZE1)

    # conv2 (1x1) + bias + relu.
    h2 = jnp.maximum(
        jnp.dot(pooled, w2_ref[...], preferred_element_type=jnp.float32)
        + b2_ref[...], 0.0)                                   # (npx, SIZE2)

    # Dropout: eval-mode (inference) => identity.
    # TODO(synk): training-mode dropout (PRNG mask + 1/(1-p) scaling) not implemented.

    # Flatten to PyTorch channel-major order (feature = c*pix + p) per batch:
    # one sublane->lane transpose (XLU, otherwise idle here) + pix-wide strip
    # stores into a lane-dense scratch.  fc1 weight is used unmodified.
    h2t = h2.T                                                # (SIZE2, npx)
    for n in range(tn):
        strip = h2t[:, n * pix:(n + 1) * pix]                 # (SIZE2, pix)
        for c in range(n_ch2):
            flat_scr[n:n + 1, c * pix:(c + 1) * pix] = strip[c:c + 1, :]
    flat = flat_scr[...]                                      # (tn, SIZE2*pix)

    # fc1 + relu
    z1 = jnp.maximum(
        jnp.dot(flat, w3_ref[...], preferred_element_type=jnp.float32)
        + b3_ref[...], 0.0)                                   # (tn, SIZE4)

    # fc2 + softmax(dim=1), exact divide (keeps the 1e-5 self-check).
    z2 = jnp.dot(z1, w4_ref[...], preferred_element_type=jnp.float32) + b4_ref[...]
    z2 = z2 - jnp.max(z2, axis=1, keepdims=True)
    e = jnp.exp(z2)
    o_ref[...] = e / jnp.sum(e, axis=1, keepdims=True)


# ---------------------------------------------------------------------------
# Forward wrapper: batch-tiled grid, weights VMEM-resident across grid steps.
# ---------------------------------------------------------------------------
@functools.partial(jax.jit, static_argnames=("tile_n",))
def cnn2d_forward(x, params, tile_n=8):
    """x: (N, C, H, W) float32 (NCHW, like PyTorch)."""
    N, C, H, W = x.shape
    assert H % 2 == 0 and W % 2 == 0, "maxpool(2,2) needs even spatial dims"
    ph, pw = H // 2, W // 2
    pix = ph * pw
    tile_n = min(tile_n, N)
    assert N % tile_n == 0, "batch must be divisible by the batch tile"
    n_tiles = N // tile_n

    # Gather the 4 offsets of each 2x2 pool window onto the row axis with
    # channels on lanes.  Row order: (tile, offset g = 2*dh+dw, local batch,
    # pooled pixel p = h'*pw + w').  This few-KiB transform is allowed to fuse
    # into the pallas_call input (no separate HBM round trip / dispatch).
    x2 = jnp.transpose(
        x.reshape(n_tiles, tile_n, C, ph, 2, pw, 2),
        (0, 4, 6, 1, 3, 5, 2),
    ).reshape(N * 4 * pix, C).astype(jnp.float32)

    kernel = functools.partial(cnn2d_kernel, pix=pix)

    def weight_spec(shape):
        # Constant index_map -> weight block is fetched once and stays
        # VMEM-resident across all batch-tile grid steps.
        return pl.BlockSpec(shape, lambda t: (0, 0))

    return pl.pallas_call(
        kernel,
        out_shape=jax.ShapeDtypeStruct((N, NUM_CLASSES), jnp.float32),
        grid=(n_tiles,),
        in_specs=[
            pl.BlockSpec((4 * tile_n * pix, C), lambda t: (t, 0)),   # activations
            weight_spec((C, SIZE1)), weight_spec((1, SIZE1)),        # conv1
            weight_spec((SIZE1, SIZE2)), weight_spec((1, SIZE2)),    # conv2
            weight_spec((SIZE2 * pix, SIZE4)), weight_spec((1, SIZE4)),  # fc1
            weight_spec((SIZE4, NUM_CLASSES)), weight_spec((1, NUM_CLASSES)),  # fc2
        ],
        out_specs=pl.BlockSpec((tile_n, NUM_CLASSES), lambda t: (t, 0)),
        scratch_shapes=[pltpu.VMEM((tile_n, SIZE2 * pix), jnp.float32)],
        compiler_params=pltpu.CompilerParams(
            dimension_semantics=("parallel",),           # v7x: shard tiles over TCs
            allow_input_fusion=[True] + [False] * 8,     # fuse the x2 gather/transpose
        ),
    )(x2, params["w1"], params["b1"], params["w2"], params["b2"],
      params["w3"], params["b3"], params["w4"], params["b4"])


# ---------------------------------------------------------------------------
# Deterministic parameter init (PyTorch-style uniform(-1/sqrt(fan_in), ...))
# ---------------------------------------------------------------------------
def init_params(key, pca_components, img_width):
    size3 = SIZE2 * (img_width // 2) * (img_width // 2)
    ks = jax.random.split(key, 8)

    def u(k, shape, fan_in):
        bound = 1.0 / (fan_in ** 0.5)
        return jax.random.uniform(k, shape, jnp.float32, -bound, bound)

    return {
        # conv1.weight (SIZE1, C, 1, 1) stored transposed as (C, SIZE1)
        "w1": u(ks[0], (pca_components, SIZE1), pca_components),
        "b1": u(ks[1], (1, SIZE1), pca_components),
        # conv2.weight (SIZE2, SIZE1, 1, 1) stored as (SIZE1, SIZE2)
        "w2": u(ks[2], (SIZE1, SIZE2), SIZE1),
        "b2": u(ks[3], (1, SIZE2), SIZE1),
        # fc1.weight (SIZE4, SIZE3) stored as (SIZE3, SIZE4), rows channel-major
        "w3": u(ks[4], (size3, SIZE4), size3),
        "b3": u(ks[5], (1, SIZE4), size3),
        # fc2.weight (2, SIZE4) stored as (SIZE4, 2)
        "w4": u(ks[6], (SIZE4, NUM_CLASSES), SIZE4),
        "b4": u(ks[7], (1, NUM_CLASSES), SIZE4),
    }


# ---------------------------------------------------------------------------
# Pure-JAX reference (same math as the PyTorch forward, eval mode)
# ---------------------------------------------------------------------------
def reference(x, p):
    N, C, H, W = x.shape
    h1 = jnp.einsum("nchw,ck->nkhw", x, p["w1"]) + p["b1"][0][None, :, None, None]
    h1 = jnp.maximum(h1, 0.0)
    h1 = h1.reshape(N, SIZE1, H // 2, 2, W // 2, 2).max(axis=(3, 5))
    h2 = jnp.einsum("nchw,ck->nkhw", h1, p["w2"]) + p["b2"][0][None, :, None, None]
    h2 = jnp.maximum(h2, 0.0)
    flat = h2.reshape(N, -1)
    z1 = jnp.maximum(flat @ p["w3"] + p["b3"], 0.0)
    z2 = z1 @ p["w4"] + p["b4"]
    return jax.nn.softmax(z2, axis=1)


if __name__ == "__main__":
    batch = 2
    pca_components = 4
    img_width = 16  # even (maxpool 2x2); SIZE3 = 10 * (16/2)^2 = 640

    key = jax.random.PRNGKey(0)
    x = jax.random.normal(key, (batch, pca_components, img_width, img_width),
                          dtype=jnp.float32)
    params = init_params(jax.random.PRNGKey(42), pca_components, img_width)

    out = jax.block_until_ready(cnn2d_forward(x, params))
    ref = jax.block_until_ready(reference(x, params))
    assert out.shape == (batch, NUM_CLASSES)
    assert jnp.allclose(out, ref, atol=1e-5, rtol=1e-5), "mismatch vs reference"

    print("KERNEL_OK")
</pallas_src>

<mosaic_0001>
module attributes {stable_mosaic.version = 11 : i64} {
  func.func @cnn2d_kernel(%arg0: i32, %arg1: memref<512x4xf32, #tpu.memory_space<vmem>>, %arg2: memref<4x10xf32, #tpu.memory_space<vmem>>, %arg3: memref<1x10xf32, #tpu.memory_space<vmem>>, %arg4: memref<10x10xf32, #tpu.memory_space<vmem>>, %arg5: memref<1x10xf32, #tpu.memory_space<vmem>>, %arg6: memref<640x100xf32, #tpu.memory_space<vmem>>, %arg7: memref<1x100xf32, #tpu.memory_space<vmem>>, %arg8: memref<100x2xf32, #tpu.memory_space<vmem>>, %arg9: memref<1x2xf32, #tpu.memory_space<vmem>>, %arg10: memref<2x2xf32, #tpu.memory_space<vmem>>, %arg11: memref<2x640xf32, #tpu.memory_space<vmem>>) attributes {dimension_semantics = [#tpu.dimension_semantics<parallel>], iteration_bounds = array<i64: 1>, scalar_prefetch = 0 : i64, scratch_operands = 1 : i64, tpu.core_type = #tpu.core_type<tc>, window_params = [{transform_indices = @transform_0, window_bounds = array<i64: 512, 4>}, {pipeline_mode = #tpu.pipeline_mode<synchronous>, transform_indices = @transform_1, window_bounds = array<i64: 4, 10>}, {pipeline_mode = #tpu.pipeline_mode<synchronous>, transform_indices = @transform_2, window_bounds = array<i64: 1, 10>}, {pipeline_mode = #tpu.pipeline_mode<synchronous>, transform_indices = @transform_3, window_bounds = array<i64: 10, 10>}, {pipeline_mode = #tpu.pipeline_mode<synchronous>, transform_indices = @transform_4, window_bounds = array<i64: 1, 10>}, {pipeline_mode = #tpu.pipeline_mode<synchronous>, transform_indices = @transform_5, window_bounds = array<i64: 640, 100>}, {pipeline_mode = #tpu.pipeline_mode<synchronous>, transform_indices = @transform_6, window_bounds = array<i64: 1, 100>}, {pipeline_mode = #tpu.pipeline_mode<synchronous>, transform_indices = @transform_7, window_bounds = array<i64: 100, 2>}, {pipeline_mode = #tpu.pipeline_mode<synchronous>, transform_indices = @transform_8, window_bounds = array<i64: 1, 2>}, {transform_indices = @transform_9, window_bounds = array<i64: 2, 2>}]} {
    %c0 = arith.constant 0 : index
    %c0_0 = arith.constant 0 : index
    %0 = vector.load %arg1[%c0, %c0_0] : memref<512x4xf32, #tpu.memory_space<vmem>>, vector<512x4xf32>
    %c0_1 = arith.constant 0 : index
    %c0_2 = arith.constant 0 : index
    %1 = vector.load %arg2[%c0_1, %c0_2] : memref<4x10xf32, #tpu.memory_space<vmem>>, vector<4x10xf32>
    %cst = arith.constant dense<0.000000e+00> : vector<512x10xf32>
    %2 = tpu.matmul %0, %1, %cst {dimension_numbers = #tpu.dot_dimension_numbers<[1], [0], [0], [1], [0, 0, 1, 1], [], []>} : vector<512x4xf32>, vector<4x10xf32>, vector<512x10xf32> -> vector<512x10xf32>
    %c0_3 = arith.constant 0 : index
    %c0_4 = arith.constant 0 : index
    %3 = vector.load %arg3[%c0_3, %c0_4] : memref<1x10xf32, #tpu.memory_space<vmem>>, vector<1x10xf32>
    %4 = vector.broadcast %3 : vector<1x10xf32> to vector<512x10xf32>
    %5 = arith.addf %2, %4 : vector<512x10xf32>
    %cst_5 = arith.constant 0.000000e+00 : f32
    %6 = vector.broadcast %cst_5 : f32 to vector<512x10xf32>
    %7 = arith.maximumf %5, %6 : vector<512x10xf32>
    %8 = vector.extract_strided_slice %7 {offsets = [0, 0], sizes = [128, 10], strides = [1, 1]} : vector<512x10xf32> to vector<128x10xf32>
    %9 = vector.extract_strided_slice %7 {offsets = [128, 0], sizes = [128, 10], strides = [1, 1]} : vector<512x10xf32> to vector<128x10xf32>
    %10 = arith.maximumf %8, %9 : vector<128x10xf32>
    %11 = vector.extract_strided_slice %7 {offsets = [256, 0], sizes = [128, 10], strides = [1, 1]} : vector<512x10xf32> to vector<128x10xf32>
    %12 = arith.maximumf %10, %11 : vector<128x10xf32>
    %13 = vector.extract_strided_slice %7 {offsets = [384, 0], sizes = [128, 10], strides = [1, 1]} : vector<512x10xf32> to vector<128x10xf32>
    %14 = arith.maximumf %12, %13 : vector<128x10xf32>
    %c0_6 = arith.constant 0 : index
    %c0_7 = arith.constant 0 : index
    %15 = vector.load %arg4[%c0_6, %c0_7] : memref<10x10xf32, #tpu.memory_space<vmem>>, vector<10x10xf32>
    %cst_8 = arith.constant dense<0.000000e+00> : vector<128x10xf32>
    %16 = tpu.matmul %14, %15, %cst_8 {dimension_numbers = #tpu.dot_dimension_numbers<[1], [0], [0], [1], [0, 0, 1, 1], [], []>} : vector<128x10xf32>, vector<10x10xf32>, vector<128x10xf32> -> vector<128x10xf32>
    %c0_9 = arith.constant 0 : index
    %c0_10 = arith.constant 0 : index
    %17 = vector.load %arg5[%c0_9, %c0_10] : memref<1x10xf32, #tpu.memory_space<vmem>>, vector<1x10xf32>
    %18 = vector.broadcast %17 : vector<1x10xf32> to vector<128x10xf32>
    %19 = arith.addf %16, %18 : vector<128x10xf32>
    %cst_11 = arith.constant 0.000000e+00 : f32
    %20 = vector.broadcast %cst_11 : f32 to vector<128x10xf32>
    %21 = arith.maximumf %19, %20 : vector<128x10xf32>
    %22 = tpu.transpose %21, [1, 0] : vector<128x10xf32> -> vector<10x128xf32>
    %23 = vector.extract_strided_slice %22 {offsets = [0, 0], sizes = [10, 64], strides = [1, 1]} : vector<10x128xf32> to vector<10x64xf32>
    %24 = vector.extract_strided_slice %23 {offsets = [0, 0], sizes = [1, 64], strides = [1, 1]} : vector<10x64xf32> to vector<1x64xf32>
    %c0_12 = arith.constant 0 : index
    %c0_13 = arith.constant 0 : index
    %25 = vector.load %arg11[%c0_12, %c0_13] : memref<2x640xf32, #tpu.memory_space<vmem>>, vector<1x64xf32>
    tpu.vector_store %arg11[%c0_12, %c0_13], %24 {strides = array<i32>} : memref<2x640xf32, #tpu.memory_space<vmem>>, vector<1x64xf32>,
    %26 = vector.extract_strided_slice %23 {offsets = [1, 0], sizes = [1, 64], strides = [1, 1]} : vector<10x64xf32> to vector<1x64xf32>
    %c0_14 = arith.constant 0 : index
    %c64 = arith.constant 64 : index
    %27 = vector.load %arg11[%c0_14, %c64] : memref<2x640xf32, #tpu.memory_space<vmem>>, vector<1x64xf32>
    tpu.vector_store %arg11[%c0_14, %c64], %26 {strides = array<i32>} : memref<2x640xf32, #tpu.memory_space<vmem>>, vector<1x64xf32>,
    %28 = vector.extract_strided_slice %23 {offsets = [2, 0], sizes = [1, 64], strides = [1, 1]} : vector<10x64xf32> to vector<1x64xf32>
    %c0_15 = arith.constant 0 : index
    %c128 = arith.constant 128 : index
    %29 = vector.load %arg11[%c0_15, %c128] : memref<2x640xf32, #tpu.memory_space<vmem>>, vector<1x64xf32>
    tpu.vector_store %arg11[%c0_15, %c128], %28 {strides = array<i32>} : memref<2x640xf32, #tpu.memory_space<vmem>>, vector<1x64xf32>,
    %30 = vector.extract_strided_slice %23 {offsets = [3, 0], sizes = [1, 64], strides = [1, 1]} : vector<10x64xf32> to vector<1x64xf32>
    %c0_16 = arith.constant 0 : index
    %c192 = arith.constant 192 : index
    %31 = vector.load %arg11[%c0_16, %c192] : memref<2x640xf32, #tpu.memory_space<vmem>>, vector<1x64xf32>
    tpu.vector_store %arg11[%c0_16, %c192], %30 {strides = array<i32>} : memref<2x640xf32, #tpu.memory_space<vmem>>, vector<1x64xf32>,
    %32 = vector.extract_strided_slice %23 {offsets = [4, 0], sizes = [1, 64], strides = [1, 1]} : vector<10x64xf32> to vector<1x64xf32>
    %c0_17 = arith.constant 0 : index
    %c256 = arith.constant 256 : index
    %33 = vector.load %arg11[%c0_17, %c256] : memref<2x640xf32, #tpu.memory_space<vmem>>, vector<1x64xf32>
    tpu.vector_store %arg11[%c0_17, %c256], %32 {strides = array<i32>} : memref<2x640xf32, #tpu.memory_space<vmem>>, vector<1x64xf32>,
    %34 = vector.extract_strided_slice %23 {offsets = [5, 0], sizes = [1, 64], strides = [1, 1]} : vector<10x64xf32> to vector<1x64xf32>
    %c0_18 = arith.constant 0 : index
    %c320 = arith.constant 320 : index
    %35 = vector.load %arg11[%c0_18, %c320] : memref<2x640xf32, #tpu.memory_space<vmem>>, vector<1x64xf32>
    tpu.vector_store %arg11[%c0_18, %c320], %34 {strides = array<i32>} : memref<2x640xf32, #tpu.memory_space<vmem>>, vector<1x64xf32>,
    %36 = vector.extract_strided_slice %23 {offsets = [6, 0], sizes = [1, 64], strides = [1, 1]} : vector<10x64xf32> to vector<1x64xf32>
    %c0_19 = arith.constant 0 : index
    %c384 = arith.constant 384 : index
    %37 = vector.load %arg11[%c0_19, %c384] : memref<2x640xf32, #tpu.memory_space<vmem>>, vector<1x64xf32>
    tpu.vector_store %arg11[%c0_19, %c384], %36 {strides = array<i32>} : memref<2x640xf32, #tpu.memory_space<vmem>>, vector<1x64xf32>,
    %38 = vector.extract_strided_slice %23 {offsets = [7, 0], sizes = [1, 64], strides = [1, 1]} : vector<10x64xf32> to vector<1x64xf32>
    %c0_20 = arith.constant 0 : index
    %c448 = arith.constant 448 : index
    %39 = vector.load %arg11[%c0_20, %c448] : memref<2x640xf32, #tpu.memory_space<vmem>>, vector<1x64xf32>
    tpu.vector_store %arg11[%c0_20, %c448], %38 {strides = array<i32>} : memref<2x640xf32, #tpu.memory_space<vmem>>, vector<1x64xf32>,
    %40 = vector.extract_strided_slice %23 {offsets = [8, 0], sizes = [1, 64], strides = [1, 1]} : vector<10x64xf32> to vector<1x64xf32>
    %c0_21 = arith.constant 0 : index
    %c512 = arith.constant 512 : index
    %41 = vector.load %arg11[%c0_21, %c512] : memref<2x640xf32, #tpu.memory_space<vmem>>, vector<1x64xf32>
    tpu.vector_store %arg11[%c0_21, %c512], %40 {strides = array<i32>} : memref<2x640xf32, #tpu.memory_space<vmem>>, vector<1x64xf32>,
    %42 = vector.extract_strided_slice %23 {offsets = [9, 0], sizes = [1, 64], strides = [1, 1]} : vector<10x64xf32> to vector<1x64xf32>
    %c0_22 = arith.constant 0 : index
    %c576 = arith.constant 576 : index
    %43 = vector.load %arg11[%c0_22, %c576] : memref<2x640xf32, #tpu.memory_space<vmem>>, vector<1x64xf32>
    tpu.vector_store %arg11[%c0_22, %c576], %42 {strides = array<i32>} : memref<2x640xf32, #tpu.memory_space<vmem>>, vector<1x64xf32>,
    %44 = vector.extract_strided_slice %22 {offsets = [0, 64], sizes = [10, 64], strides = [1, 1]} : vector<10x128xf32> to vector<10x64xf32>
    %45 = vector.extract_strided_slice %44 {offsets = [0, 0], sizes = [1, 64], strides = [1, 1]} : vector<10x64xf32> to vector<1x64xf32>
    %c1 = arith.constant 1 : index
    %c0_23 = arith.constant 0 : index
    %46 = vector.load %arg11[%c1, %c0_23] : memref<2x640xf32, #tpu.memory_space<vmem>>, vector<1x64xf32>
    tpu.vector_store %arg11[%c1, %c0_23], %45 {strides = array<i32>} : memref<2x640xf32, #tpu.memory_space<vmem>>, vector<1x64xf32>,
    %47 = vector.extract_strided_slice %44 {offsets = [1, 0], sizes = [1, 64], strides = [1, 1]} : vector<10x64xf32> to vector<1x64xf32>
    %c1_24 = arith.constant 1 : index
    %c64_25 = arith.constant 64 : index
    %48 = vector.load %arg11[%c1_24, %c64_25] : memref<2x640xf32, #tpu.memory_space<vmem>>, vector<1x64xf32>
    tpu.vector_store %arg11[%c1_24, %c64_25], %47 {strides = array<i32>} : memref<2x640xf32, #tpu.memory_space<vmem>>, vector<1x64xf32>,
    %49 = vector.extract_strided_slice %44 {offsets = [2, 0], sizes = [1, 64], strides = [1, 1]} : vector<10x64xf32> to vector<1x64xf32>
    %c1_26 = arith.constant 1 : index
    %c128_27 = arith.constant 128 : index
    %50 = vector.load %arg11[%c1_26, %c128_27] : memref<2x640xf32, #tpu.memory_space<vmem>>, vector<1x64xf32>
    tpu.vector_store %arg11[%c1_26, %c128_27], %49 {strides = array<i32>} : memref<2x640xf32, #tpu.memory_space<vmem>>, vector<1x64xf32>,
    %51 = vector.extract_strided_slice %44 {offsets = [3, 0], sizes = [1, 64], strides = [1, 1]} : vector<10x64xf32> to vector<1x64xf32>
    %c1_28 = arith.constant 1 : index
    %c192_29 = arith.constant 192 : index
    %52 = vector.load %arg11[%c1_28, %c192_29] : memref<2x640xf32, #tpu.memory_space<vmem>>, vector<1x64xf32>
    tpu.vector_store %arg11[%c1_28, %c192_29], %51 {strides = array<i32>} : memref<2x640xf32, #tpu.memory_space<vmem>>, vector<1x64xf32>,
    %53 = vector.extract_strided_slice %44 {offsets = [4, 0], sizes = [1, 64], strides = [1, 1]} : vector<10x64xf32> to vector<1x64xf32>
    %c1_30 = arith.constant 1 : index
    %c256_31 = arith.constant 256 : index
    %54 = vector.load %arg11[%c1_30, %c256_31] : memref<2x640xf32, #tpu.memory_space<vmem>>, vector<1x64xf32>
    tpu.vector_store %arg11[%c1_30, %c256_31], %53 {strides = array<i32>} : memref<2x640xf32, #tpu.memory_space<vmem>>, vector<1x64xf32>,
    %55 = vector.extract_strided_slice %44 {offsets = [5, 0], sizes = [1, 64], strides = [1, 1]} : vector<10x64xf32> to vector<1x64xf32>
    %c1_32 = arith.constant 1 : index
    %c320_33 = arith.constant 320 : index
    %56 = vector.load %arg11[%c1_32, %c320_33] : memref<2x640xf32, #tpu.memory_space<vmem>>, vector<1x64xf32>
    tpu.vector_store %arg11[%c1_32, %c320_33], %55 {strides = array<i32>} : memref<2x640xf32, #tpu.memory_space<vmem>>, vector<1x64xf32>,
    %57 = vector.extract_strided_slice %44 {offsets = [6, 0], sizes = [1, 64], strides = [1, 1]} : vector<10x64xf32> to vector<1x64xf32>
    %c1_34 = arith.constant 1 : index
    %c384_35 = arith.constant 384 : index
    %58 = vector.load %arg11[%c1_34, %c384_35] : memref<2x640xf32, #tpu.memory_space<vmem>>, vector<1x64xf32>
    tpu.vector_store %arg11[%c1_34, %c384_35], %57 {strides = array<i32>} : memref<2x640xf32, #tpu.memory_space<vmem>>, vector<1x64xf32>,
    %59 = vector.extract_strided_slice %44 {offsets = [7, 0], sizes = [1, 64], strides = [1, 1]} : vector<10x64xf32> to vector<1x64xf32>
    %c1_36 = arith.constant 1 : index
    %c448_37 = arith.constant 448 : index
    %60 = vector.load %arg11[%c1_36, %c448_37] : memref<2x640xf32, #tpu.memory_space<vmem>>, vector<1x64xf32>
    tpu.vector_store %arg11[%c1_36, %c448_37], %59 {strides = array<i32>} : memref<2x640xf32, #tpu.memory_space<vmem>>, vector<1x64xf32>,
    %61 = vector.extract_strided_slice %44 {offsets = [8, 0], sizes = [1, 64], strides = [1, 1]} : vector<10x64xf32> to vector<1x64xf32>
    %c1_38 = arith.constant 1 : index
    %c512_39 = arith.constant 512 : index
    %62 = vector.load %arg11[%c1_38, %c512_39] : memref<2x640xf32, #tpu.memory_space<vmem>>, vector<1x64xf32>
    tpu.vector_store %arg11[%c1_38, %c512_39], %61 {strides = array<i32>} : memref<2x640xf32, #tpu.memory_space<vmem>>, vector<1x64xf32>,
    %63 = vector.extract_strided_slice %44 {offsets = [9, 0], sizes = [1, 64], strides = [1, 1]} : vector<10x64xf32> to vector<1x64xf32>
    %c1_40 = arith.constant 1 : index
    %c576_41 = arith.constant 576 : index
    %64 = vector.load %arg11[%c1_40, %c576_41] : memref<2x640xf32, #tpu.memory_space<vmem>>, vector<1x64xf32>
    tpu.vector_store %arg11[%c1_40, %c576_41], %63 {strides = array<i32>} : memref<2x640xf32, #tpu.memory_space<vmem>>, vector<1x64xf32>,
    %c0_42 = arith.constant 0 : index
    %c0_43 = arith.constant 0 : index
    %65 = vector.load %arg11[%c0_42, %c0_43] : memref<2x640xf32, #tpu.memory_space<vmem>>, vector<2x640xf32>
    %c0_44 = arith.constant 0 : index
    %c0_45 = arith.constant 0 : index
    %66 = vector.load %arg6[%c0_44, %c0_45] : memref<640x100xf32, #tpu.memory_space<vmem>>, vector<640x100xf32>
    %cst_46 = arith.constant dense<0.000000e+00> : vector<2x100xf32>
    %67 = tpu.matmul %65, %66, %cst_46 {dimension_numbers = #tpu.dot_dimension_numbers<[1], [0], [0], [1], [0, 0, 1, 1], [], []>} : vector<2x640xf32>, vector<640x100xf32>, vector<2x100xf32> -> vector<2x100xf32>
    %c0_47 = arith.constant 0 : index
    %c0_48 = arith.constant 0 : index
    %68 = vector.load %arg7[%c0_47, %c0_48] : memref<1x100xf32, #tpu.memory_space<vmem>>, vector<1x100xf32>
    %69 = vector.broadcast %68 : vector<1x100xf32> to vector<2x100xf32>
    %70 = arith.addf %67, %69 : vector<2x100xf32>
    %cst_49 = arith.constant 0.000000e+00 : f32
    %71 = vector.broadcast %cst_49 : f32 to vector<2x100xf32>
    %72 = arith.maximumf %70, %71 : vector<2x100xf32>
    %c0_50 = arith.constant 0 : index
    %c0_51 = arith.constant 0 : index
    %73 = vector.load %arg8[%c0_50, %c0_51] : memref<100x2xf32, #tpu.memory_space<vmem>>, vector<100x2xf32>
    %cst_52 = arith.constant dense<0.000000e+00> : vector<2x2xf32>
    %74 = tpu.matmul %72, %73, %cst_52 {dimension_numbers = #tpu.dot_dimension_numbers<[1], [0], [0], [1], [0, 0, 1, 1], [], []>} : vector<2x100xf32>, vector<100x2xf32>, vector<2x2xf32> -> vector<2x2xf32>
    %c0_53 = arith.constant 0 : index
    %c0_54 = arith.constant 0 : index
    %75 = vector.load %arg9[%c0_53, %c0_54] : memref<1x2xf32, #tpu.memory_space<vmem>>, vector<1x2xf32>
    %76 = vector.broadcast %75 : vector<1x2xf32> to vector<2x2xf32>
    %77 = arith.addf %74, %76 : vector<2x2xf32>
    %cst_55 = arith.constant dense<0xFF800000> : vector<2xf32>
    %78 = vector.multi_reduction <maximumf>, %77, %cst_55 [1] : vector<2x2xf32> to vector<2xf32>
    %79 = vector.shape_cast %78 : vector<2xf32> to vector<2x1xf32>
    %80 = vector.broadcast %79 : vector<2x1xf32> to vector<2x2xf32>
    %81 = arith.subf %77, %80 : vector<2x2xf32>
    %82 = math.exp %81 : vector<2x2xf32>
    %cst_56 = arith.constant dense<0.000000e+00> : vector<2xf32>
    %83 = vector.multi_reduction <add>, %82, %cst_56 [1] : vector<2x2xf32> to vector<2xf32>
    %84 = vector.shape_cast %83 : vector<2xf32> to vector<2x1xf32>
    %85 = vector.broadcast %84 : vector<2x1xf32> to vector<2x2xf32>
    %86 = arith.divf %82, %85 : vector<2x2xf32>
    %c0_57 = arith.constant 0 : index
    %c0_58 = arith.constant 0 : index
    %87 = vector.load %arg10[%c0_57, %c0_58] : memref<2x2xf32, #tpu.memory_space<vmem>>, vector<2x2xf32>
    tpu.vector_store %arg10[%c0_57, %c0_58], %86 {strides = array<i32>} : memref<2x2xf32, #tpu.memory_space<vmem>>, vector<2x2xf32>,
    return
  }
  func.func @transform_0(%arg0: i32) -> (i32, i32) {
    %c0_i32 = arith.constant 0 : i32
    %c0_i32_0 = arith.constant 0 : i32
    return %arg0, %c0_i32 : i32, i32
  }
  func.func @transform_1(%arg0: i32) -> (i32, i32) {
    %c0_i32 = arith.constant 0 : i32
    %c0_i32_0 = arith.constant 0 : i32
    %c0_i32_1 = arith.constant 0 : i32
    return %c0_i32, %c0_i32_0 : i32, i32
  }
  func.func @transform_2(%arg0: i32) -> (i32, i32) {
    %c0_i32 = arith.constant 0 : i32
    %c0_i32_0 = arith.constant 0 : i32
    %c0_i32_1 = arith.constant 0 : i32
    return %c0_i32, %c0_i32_0 : i32, i32
  }
  func.func @transform_3(%arg0: i32) -> (i32, i32) {
    %c0_i32 = arith.constant 0 : i32
    %c0_i32_0 = arith.constant 0 : i32
    %c0_i32_1 = arith.constant 0 : i32
    return %c0_i32, %c0_i32_0 : i32, i32
  }
  func.func @transform_4(%arg0: i32) -> (i32, i32) {
    %c0_i32 = arith.constant 0 : i32
    %c0_i32_0 = arith.constant 0 : i32
    %c0_i32_1 = arith.constant 0 : i32
    return %c0_i32, %c0_i32_0 : i32, i32
  }
  func.func @transform_5(%arg0: i32) -> (i32, i32) {
    %c0_i32 = arith.constant 0 : i32
    %c0_i32_0 = arith.constant 0 : i32
    %c0_i32_1 = arith.constant 0 : i32
    return %c0_i32, %c0_i32_0 : i32, i32
  }
  func.func @transform_6(%arg0: i32) -> (i32, i32) {
    %c0_i32 = arith.constant 0 : i32
    %c0_i32_0 = arith.constant 0 : i32
    %c0_i32_1 = arith.constant 0 : i32
    return %c0_i32, %c0_i32_0 : i32, i32
  }
  func.func @transform_7(%arg0: i32) -> (i32, i32) {
    %c0_i32 = arith.constant 0 : i32
    %c0_i32_0 = arith.constant 0 : i32
    %c0_i32_1 = arith.constant 0 : i32
    return %c0_i32, %c0_i32_0 : i32, i32
  }
  func.func @transform_8(%arg0: i32) -> (i32, i32) {
    %c0_i32 = arith.constant 0 : i32
    %c0_i32_0 = arith.constant 0 : i32
    %c0_i32_1 = arith.constant 0 : i32
    return %c0_i32, %c0_i32_0 : i32, i32
  }
  func.func @transform_9(%arg0: i32) -> (i32, i32) {
    %c0_i32 = arith.constant 0 : i32
    %c0_i32_0 = arith.constant 0 : i32
    return %arg0, %c0_i32 : i32, i32
  }
}

</mosaic_0001>

<llo_original>
// kernel: cnn2d_forward.1
$region0: #{cnn2d_forward.1}
  #allocation0 [shape = 'u32[]', space=smem, size = 0x4, offset = 0x4, fixed_abs, tag = 'smem constant byte address 0x4 - core index']
  #allocation1 [shape = 'u32[72,128]{1,0:T(1,128)}', space=vmem, size = 0x9000, scoped, tag = 'internal scratch']
  #allocation2 [shape = 'f32[2,640]{1,0:T(2,128)}', space=vmem, size = 0x1400, scoped, tag = 'scratch operand']
  %s0 = inlined_call_operand.vmem [shape: f32[512,4], index: 0, kind: input, shape index: {}]
  %s1 = inlined_call_operand.vmem [shape: f32[4,10], index: 1, kind: input, shape index: {}]
  %s2 = inlined_call_operand.vmem [shape: f32[1,10], index: 2, kind: input, shape index: {}]
  %s3 = inlined_call_operand.vmem [shape: f32[10,10], index: 3, kind: input, shape index: {}]
  %s4 = inlined_call_operand.vmem [shape: f32[1,10], index: 4, kind: input, shape index: {}]
  %s5 = inlined_call_operand.vmem [shape: f32[640,100], index: 5, kind: input, shape index: {}]
  %s6 = inlined_call_operand.vmem [shape: f32[1,100], index: 6, kind: input, shape index: {}]
  %s7 = inlined_call_operand.vmem [shape: f32[100,2], index: 7, kind: input, shape index: {}]
  %s8 = inlined_call_operand.vmem [shape: f32[1,2], index: 8, kind: input, shape index: {}]
  %s9 = inlined_call_operand.hbm [shape: f32[2,2], index: 9, kind: output, shape index: {}]
  %s10 = sld [smem:[#allocation0]]
  $region46: #{cnn2d_forward.1} parent=0
    _
  %s12 = ssub.s32 1, %s10
  %s13 = scalar_select 0, %s12, %s10
  $region1: #{cnn2d_forward.1} parent=0
    #allocation3 [shape = 'u8[1024]{0}', space=vmem, size = 0x400, scoped, tag = 'output window, operand 0, single buffered']
    #allocation4 [shape = 's32[1]{0}', space=sflag, size = 0x4, scoped, tag = 'scoped memory for cnn2d_forward.1']
    %14 = vsyncpa [#allocation4], 0
    // Predicated region
    $region2: #{cnn2d_forward.1} parent=1 // pred_check
      _
    $region3: #{cnn2d_forward.1} parent=1 // pred_check_branch
      %16 = sbr.rel (0) target = $region5
    $region4: #{cnn2d_forward.1} parent=1 // pred_region
      _
    $region5: #{cnn2d_forward.1} parent=1 // pred_fallthru
      _
    // Predicated region
    $region6: #{cnn2d_forward.1} parent=1 // pred_check
      _
    $region7: #{cnn2d_forward.1} parent=1 // pred_check_branch
      %18 = sbr.rel (0) target = $region9
    $region8: #{cnn2d_forward.1} parent=1 // pred_region
      _
    $region9: #{cnn2d_forward.1} parent=1 // pred_fallthru
      _
    // Predicated region
    $region10: #{cnn2d_forward.1} parent=1 // pred_check
      _
    $region11: #{cnn2d_forward.1} parent=1 // pred_check_branch
      %20 = sbr.rel (0) target = $region13
    $region12: #{cnn2d_forward.1} parent=1 // pred_region
      _
    $region13: #{cnn2d_forward.1} parent=1 // pred_fallthru
      _
    // Predicated region
    $region14: #{cnn2d_forward.1} parent=1 // pred_check
      _
    $region15: #{cnn2d_forward.1} parent=1 // pred_check_branch
      %22 = sbr.rel (0) target = $region17
    $region16: #{cnn2d_forward.1} parent=1 // pred_region
      _
    $region17: #{cnn2d_forward.1} parent=1 // pred_fallthru
      _
    // Predicated region
    $region18: #{cnn2d_forward.1} parent=1 // pred_check
      _
    $region19: #{cnn2d_forward.1} parent=1 // pred_check_branch
      %24 = sbr.rel (0) target = $region21
    $region20: #{cnn2d_forward.1} parent=1 // pred_region
      _
    $region21: #{cnn2d_forward.1} parent=1 // pred_fallthru
      _
    // Predicated region
    $region22: #{cnn2d_forward.1} parent=1 // pred_check
      _
    $region23: #{cnn2d_forward.1} parent=1 // pred_check_branch
      %26 = sbr.rel (0) target = $region25
    $region24: #{cnn2d_forward.1} parent=1 // pred_region
      _
    $region25: #{cnn2d_forward.1} parent=1 // pred_fallthru
      _
    // Predicated region
    $region26: #{cnn2d_forward.1} parent=1 // pred_check
      _
    $region27: #{cnn2d_forward.1} parent=1 // pred_check_branch
      %28 = sbr.rel (0) target = $region29
    $region28: #{cnn2d_forward.1} parent=1 // pred_region
      _
    $region29: #{cnn2d_forward.1} parent=1 // pred_fallthru
      _
    // Predicated region
    $region30: #{cnn2d_forward.1} parent=1 // pred_check
      _
    $region31: #{cnn2d_forward.1} parent=1 // pred_check_branch
      %30 = sbr.rel (0) target = $region33
    $region32: #{cnn2d_forward.1} parent=1 // pred_region
      _
    $region33: #{cnn2d_forward.1} parent=1 // pred_fallthru
      _
    // Predicated region
    $region34: #{cnn2d_forward.1} parent=1 // pred_check
      _
    $region35: #{cnn2d_forward.1} parent=1 // pred_check_branch
      %32 = sbr.rel (0) target = $region37
    $region36: #{cnn2d_forward.1} parent=1 // pred_region
      _
    $region37: #{cnn2d_forward.1} parent=1 // pred_fallthru
      _
    %v33 = vld [vmem:[%s0] sm:$0xff]
    %v34 = vld [vmem:[%s0 + $0x8] sm:$0xff]
    %v35 = vld [vmem:[%s0 + $0x10] sm:$0xff]
    %v36 = vld [vmem:[%s0 + $0x18] sm:$0xff]
    %v37 = vld [vmem:[%s0 + $0x20] sm:$0xff]
    %v38 = vld [vmem:[%s0 + $0x28] sm:$0xff]
    %v39 = vld [vmem:[%s0 + $0x30] sm:$0xff]
    %v40 = vld [vmem:[%s0 + $0x38] sm:$0xff]
    %v41 = vld [vmem:[%s0 + $0x40] sm:$0xff]
    %v42 = vld [vmem:[%s0 + $0x48] sm:$0xff]
    %v43 = vld [vmem:[%s0 + $0x50] sm:$0xff]
    %v44 = vld [vmem:[%s0 + $0x58] sm:$0xff]
    %v45 = vld [vmem:[%s0 + $0x60] sm:$0xff]
    %v46 = vld [vmem:[%s0 + $0x68] sm:$0xff]
    %v47 = vld [vmem:[%s0 + $0x70] sm:$0xff]
    %v48 = vld [vmem:[%s0 + $0x78] sm:$0xff]
    %v49 = vld [vmem:[%s0 + $0x80] sm:$0xff]
    %v50 = vld [vmem:[%s0 + $0x88] sm:$0xff]
    %v51 = vld [vmem:[%s0 + $0x90] sm:$0xff]
    %v52 = vld [vmem:[%s0 + $0x98] sm:$0xff]
    %v53 = vld [vmem:[%s0 + $0xa0] sm:$0xff]
    %v54 = vld [vmem:[%s0 + $0xa8] sm:$0xff]
    %v55 = vld [vmem:[%s0 + $0xb0] sm:$0xff]
    %v56 = vld [vmem:[%s0 + $0xb8] sm:$0xff]
    %v57 = vld [vmem:[%s0 + $0xc0] sm:$0xff]
    %v58 = vld [vmem:[%s0 + $0xc8] sm:$0xff]
    %v59 = vld [vmem:[%s0 + $0xd0] sm:$0xff]
    %v60 = vld [vmem:[%s0 + $0xd8] sm:$0xff]
    %v61 = vld [vmem:[%s0 + $0xe0] sm:$0xff]
    %v62 = vld [vmem:[%s0 + $0xe8] sm:$0xff]
    %v63 = vld [vmem:[%s0 + $0xf0] sm:$0xff]
    %v64 = vld [vmem:[%s0 + $0xf8] sm:$0xff]
    %v65 = vld [vmem:[%s0 + $0x100] sm:$0xff]
    %v66 = vld [vmem:[%s0 + $0x108] sm:$0xff]
    %v67 = vld [vmem:[%s0 + $0x110] sm:$0xff]
    %v68 = vld [vmem:[%s0 + $0x118] sm:$0xff]
    %v69 = vld [vmem:[%s0 + $0x120] sm:$0xff]
    %v70 = vld [vmem:[%s0 + $0x128] sm:$0xff]
    %v71 = vld [vmem:[%s0 + $0x130] sm:$0xff]
    %v72 = vld [vmem:[%s0 + $0x138] sm:$0xff]
    %v73 = vld [vmem:[%s0 + $0x140] sm:$0xff]
    %v74 = vld [vmem:[%s0 + $0x148] sm:$0xff]
    %v75 = vld [vmem:[%s0 + $0x150] sm:$0xff]
    %v76 = vld [vmem:[%s0 + $0x158] sm:$0xff]
    %v77 = vld [vmem:[%s0 + $0x160] sm:$0xff]
    %v78 = vld [vmem:[%s0 + $0x168] sm:$0xff]
    %v79 = vld [vmem:[%s0 + $0x170] sm:$0xff]
    %v80 = vld [vmem:[%s0 + $0x178] sm:$0xff]
    %v81 = vld [vmem:[%s0 + $0x180] sm:$0xff]
    %v82 = vld [vmem:[%s0 + $0x188] sm:$0xff]
    %v83 = vld [vmem:[%s0 + $0x190] sm:$0xff]
    %v84 = vld [vmem:[%s0 + $0x198] sm:$0xff]
    %v85 = vld [vmem:[%s0 + $0x1a0] sm:$0xff]
    %v86 = vld [vmem:[%s0 + $0x1a8] sm:$0xff]
    %v87 = vld [vmem:[%s0 + $0x1b0] sm:$0xff]
    %v88 = vld [vmem:[%s0 + $0x1b8] sm:$0xff]
    %v89 = vld [vmem:[%s0 + $0x1c0] sm:$0xff]
    %v90 = vld [vmem:[%s0 + $0x1c8] sm:$0xff]
    %v91 = vld [vmem:[%s0 + $0x1d0] sm:$0xff]
    %v92 = vld [vmem:[%s0 + $0x1d8] sm:$0xff]
    %v93 = vld [vmem:[%s0 + $0x1e0] sm:$0xff]
    %v94 = vld [vmem:[%s0 + $0x1e8] sm:$0xff]
    %v95 = vld [vmem:[%s0 + $0x1f0] sm:$0xff]
    %v96 = vld [vmem:[%s0 + $0x1f8] sm:$0xff]
    %v97 = vld [vmem:[%s1] sm:$0xf]
    %v98 = vld [vmem:[%s2] sm:$0x1]
    %v100 = vperm.slane %v98, 0
    %vm102 = vcmask 31744
    %v104 = vsel %vm102, %v33, 0
    %v107 = vsel %vm102, %v34, 0
    %v110 = vsel %vm102, %v35, 0
    %v113 = vsel %vm102, %v36, 0
    %v116 = vsel %vm102, %v37, 0
    %v119 = vsel %vm102, %v38, 0
    %v122 = vsel %vm102, %v39, 0
    %v125 = vsel %vm102, %v40, 0
    %v128 = vsel %vm102, %v41, 0
    %v131 = vsel %vm102, %v42, 0
    %v134 = vsel %vm102, %v43, 0
    %v137 = vsel %vm102, %v44, 0
    %v140 = vsel %vm102, %v45, 0
    %v143 = vsel %vm102, %v46, 0
    %v146 = vsel %vm102, %v47, 0
    %v149 = vsel %vm102, %v48, 0
    %v152 = vsel %vm102, %v49, 0
    %v155 = vsel %vm102, %v50, 0
    %v158 = vsel %vm102, %v51, 0
    %v161 = vsel %vm102, %v52, 0
    %v164 = vsel %vm102, %v53, 0
    %v167 = vsel %vm102, %v54, 0
    %v170 = vsel %vm102, %v55, 0
    %v173 = vsel %vm102, %v56, 0
    %v176 = vsel %vm102, %v57, 0
    %v179 = vsel %vm102, %v58, 0
    %v182 = vsel %vm102, %v59, 0
    %v185 = vsel %vm102, %v60, 0
    %v188 = vsel %vm102, %v61, 0
    %v191 = vsel %vm102, %v62, 0
    %v194 = vsel %vm102, %v63, 0
    %v197 = vsel %vm102, %v64, 0
    %v200 = vsel %vm102, %v65, 0
    %v203 = vsel %vm102, %v66, 0
    %v206 = vsel %vm102, %v67, 0
    %v209 = vsel %vm102, %v68, 0
    %v212 = vsel %vm102, %v69, 0
    %v215 = vsel %vm102, %v70, 0
    %v218 = vsel %vm102, %v71, 0
    %v221 = vsel %vm102, %v72, 0
    %v224 = vsel %vm102, %v73, 0
    %v227 = vsel %vm102, %v74, 0
    %v230 = vsel %vm102, %v75, 0
    %v233 = vsel %vm102, %v76, 0
    %v236 = vsel %vm102, %v77, 0
    %v239 = vsel %vm102, %v78, 0
    %v242 = vsel %vm102, %v79, 0
    %v245 = vsel %vm102, %v80, 0
    %v248 = vsel %vm102, %v81, 0
    %v251 = vsel %vm102, %v82, 0
    %v254 = vsel %vm102, %v83, 0
    %v257 = vsel %vm102, %v84, 0
    %v260 = vsel %vm102, %v85, 0
    %v263 = vsel %vm102, %v86, 0
    %v266 = vsel %vm102, %v87, 0
    %v269 = vsel %vm102, %v88, 0
    %v272 = vsel %vm102, %v89, 0
    %v275 = vsel %vm102, %v90, 0
    %v278 = vsel %vm102, %v91, 0
    %v281 = vsel %vm102, %v92, 0
    %v284 = vsel %vm102, %v93, 0
    %v287 = vsel %vm102, %v94, 0
    %v290 = vsel %vm102, %v95, 0
    %v293 = vsel %vm102, %v96, 0
    %vm295 = vcmask 1043456
    %v297 = vsel %vm295, %v97, 0
    %299 = vmatpush.msra.mxu0 0.0
    %300 = vmatpush.msra.mxu0 0.0
    %301 = vmatpush.msra.mxu0 0.0
    %302 = vmatpush.msra.mxu0 0.0
    %303 = vmatpush.msra.mxu0 0.0
    %304 = vmatpush.msra.mxu0 0.0
    %305 = vmatpush.msra.mxu0 0.0
    %306 = vmatpush.msra.mxu0 0.0
    %307 = vmatpush.msra.mxu0 0.0
    %308 = vmatpush.msra.mxu0 0.0
    %309 = vmatpush.msra.mxu0 0.0
    %310 = vmatpush.msra.mxu0 0.0
    %311 = vmatpush.msra.mxu0 0.0
    %312 = vmatpush.msra.mxu0 0.0
    %313 = vmatpush.msra.mxu0 0.0
    %314 = vmatpush.msra.mxu0 %v297
    %315 = vmatmul.f32.gmra.mxu0 %v104
    %v316 = vpop.f32.mrf.mxu0
    %v317 = vadd.f32 %v100, %v316
    %318 = vmatmul.f32.gmra.mxu0 %v107
    %v319 = vpop.f32.mrf.mxu0
    %v320 = vadd.f32 %v100, %v319
    %321 = vmatmul.f32.gmra.mxu0 %v110
    %v322 = vpop.f32.mrf.mxu0
    %v323 = vadd.f32 %v100, %v322
    %324 = vmatmul.f32.gmra.mxu0 %v113
    %v325 = vpop.f32.mrf.mxu0
    %v326 = vadd.f32 %v100, %v325
    %327 = vmatmul.f32.gmra.mxu0 %v116
    %v328 = vpop.f32.mrf.mxu0
    %v329 = vadd.f32 %v100, %v328
    %330 = vmatmul.f32.gmra.mxu0 %v119
    %v331 = vpop.f32.mrf.mxu0
    %v332 = vadd.f32 %v100, %v331
    %333 = vmatmul.f32.gmra.mxu0 %v122
    %v334 = vpop.f32.mrf.mxu0
    %v335 = vadd.f32 %v100, %v334
    %336 = vmatmul.f32.gmra.mxu0 %v125
    %v337 = vpop.f32.mrf.mxu0
    %v338 = vadd.f32 %v100, %v337
    %339 = vmatmul.f32.gmra.mxu0 %v128
    %v340 = vpop.f32.mrf.mxu0
    %v341 = vadd.f32 %v100, %v340
    %342 = vmatmul.f32.gmra.mxu0 %v131
    %v343 = vpop.f32.mrf.mxu0
    %v344 = vadd.f32 %v100, %v343
    %345 = vmatmul.f32.gmra.mxu0 %v134
    %v346 = vpop.f32.mrf.mxu0
    %v347 = vadd.f32 %v100, %v346
    %348 = vmatmul.f32.gmra.mxu0 %v137
    %v349 = vpop.f32.mrf.mxu0
    %v350 = vadd.f32 %v100, %v349
    %351 = vmatmul.f32.gmra.mxu0 %v140
    %v352 = vpop.f32.mrf.mxu0
    %v353 = vadd.f32 %v100, %v352
    %354 = vmatmul.f32.gmra.mxu0 %v143
    %v355 = vpop.f32.mrf.mxu0
    %v356 = vadd.f32 %v100, %v355
    %357 = vmatmul.f32.gmra.mxu0 %v146
    %v358 = vpop.f32.mrf.mxu0
    %v359 = vadd.f32 %v100, %v358
    %360 = vmatmul.f32.gmra.mxu0 %v149
    %v361 = vpop.f32.mrf.mxu0
    %v362 = vadd.f32 %v100, %v361
    %363 = vmatmul.f32.gmra.mxu0 %v152
    %v364 = vpop.f32.mrf.mxu0
    %v365 = vadd.f32 %v100, %v364
    %366 = vmatmul.f32.gmra.mxu0 %v155
    %v367 = vpop.f32.mrf.mxu0
    %v368 = vadd.f32 %v100, %v367
    %369 = vmatmul.f32.gmra.mxu0 %v158
    %v370 = vpop.f32.mrf.mxu0
    %v371 = vadd.f32 %v100, %v370
    %372 = vmatmul.f32.gmra.mxu0 %v161
    %v373 = vpop.f32.mrf.mxu0
    %v374 = vadd.f32 %v100, %v373
    %375 = vmatmul.f32.gmra.mxu0 %v164
    %v376 = vpop.f32.mrf.mxu0
    %v377 = vadd.f32 %v100, %v376
    %378 = vmatmul.f32.gmra.mxu0 %v167
    %v379 = vpop.f32.mrf.mxu0
    %v380 = vadd.f32 %v100, %v379
    %381 = vmatmul.f32.gmra.mxu0 %v170
    %v382 = vpop.f32.mrf.mxu0
    %v383 = vadd.f32 %v100, %v382
    %384 = vmatmul.f32.gmra.mxu0 %v173
    %v385 = vpop.f32.mrf.mxu0
    %v386 = vadd.f32 %v100, %v385
    %387 = vmatmul.f32.gmra.mxu0 %v176
    %v388 = vpop.f32.mrf.mxu0
    %v389 = vadd.f32 %v100, %v388
    %390 = vmatmul.f32.gmra.mxu0 %v179
    %v391 = vpop.f32.mrf.mxu0
    %v392 = vadd.f32 %v100, %v391
    %393 = vmatmul.f32.gmra.mxu0 %v182
    %v394 = vpop.f32.mrf.mxu0
    %v395 = vadd.f32 %v100, %v394
    %396 = vmatmul.f32.gmra.mxu0 %v185
    %v397 = vpop.f32.mrf.mxu0
    %v398 = vadd.f32 %v100, %v397
    %399 = vmatmul.f32.gmra.mxu0 %v188
    %v400 = vpop.f32.mrf.mxu0
    %v401 = vadd.f32 %v100, %v400
    %402 = vmatmul.f32.gmra.mxu0 %v191
    %v403 = vpop.f32.mrf.mxu0
    %v404 = vadd.f32 %v100, %v403
    %405 = vmatmul.f32.gmra.mxu0 %v194
    %v406 = vpop.f32.mrf.mxu0
    %v407 = vadd.f32 %v100, %v406
    %408 = vmatmul.f32.gmra.mxu0 %v197
    %v409 = vpop.f32.mrf.mxu0
    %v410 = vadd.f32 %v100, %v409
    %411 = vmatmul.f32.gmra.mxu0 %v200
    %v412 = vpop.f32.mrf.mxu0
    %v413 = vadd.f32 %v100, %v412
    %414 = vmatmul.f32.gmra.mxu0 %v203
    %v415 = vpop.f32.mrf.mxu0
    %v416 = vadd.f32 %v100, %v415
    %417 = vmatmul.f32.gmra.mxu0 %v206
    %v418 = vpop.f32.mrf.mxu0
    %v419 = vadd.f32 %v100, %v418
    %420 = vmatmul.f32.gmra.mxu0 %v209
    %v421 = vpop.f32.mrf.mxu0
    %v422 = vadd.f32 %v100, %v421
    %423 = vmatmul.f32.gmra.mxu0 %v212
    %v424 = vpop.f32.mrf.mxu0
    %v425 = vadd.f32 %v100, %v424
    %426 = vmatmul.f32.gmra.mxu0 %v215
    %v427 = vpop.f32.mrf.mxu0
    %v428 = vadd.f32 %v100, %v427
    %429 = vmatmul.f32.gmra.mxu0 %v218
    %v430 = vpop.f32.mrf.mxu0
    %v431 = vadd.f32 %v100, %v430
    %432 = vmatmul.f32.gmra.mxu0 %v221
    %v433 = vpop.f32.mrf.mxu0
    %v434 = vadd.f32 %v100, %v433
    %435 = vmatmul.f32.gmra.mxu0 %v224
    %v436 = vpop.f32.mrf.mxu0
    %v437 = vadd.f32 %v100, %v436
    %438 = vmatmul.f32.gmra.mxu0 %v227
    %v439 = vpop.f32.mrf.mxu0
    %v440 = vadd.f32 %v100, %v439
    %441 = vmatmul.f32.gmra.mxu0 %v230
    %v442 = vpop.f32.mrf.mxu0
    %v443 = vadd.f32 %v100, %v442
    %444 = vmatmul.f32.gmra.mxu0 %v233
    %v445 = vpop.f32.mrf.mxu0
    %v446 = vadd.f32 %v100, %v445
    %447 = vmatmul.f32.gmra.mxu0 %v236
    %v448 = vpop.f32.mrf.mxu0
    %v449 = vadd.f32 %v100, %v448
    %450 = vmatmul.f32.gmra.mxu0 %v239
    %v451 = vpop.f32.mrf.mxu0
    %v452 = vadd.f32 %v100, %v451
    %453 = vmatmul.f32.gmra.mxu0 %v242
    %v454 = vpop.f32.mrf.mxu0
    %v455 = vadd.f32 %v100, %v454
    %456 = vmatmul.f32.gmra.mxu0 %v245
    %v457 = vpop.f32.mrf.mxu0
    %v458 = vadd.f32 %v100, %v457
    %459 = vmatmul.f32.gmra.mxu0 %v248
    %v460 = vpop.f32.mrf.mxu0
    %v461 = vadd.f32 %v100, %v460
    %462 = vmatmul.f32.gmra.mxu0 %v251
    %v463 = vpop.f32.mrf.mxu0
    %v464 = vadd.f32 %v100, %v463
    %465 = vmatmul.f32.gmra.mxu0 %v254
    %v466 = vpop.f32.mrf.mxu0
    %v467 = vadd.f32 %v100, %v466
    %468 = vmatmul.f32.gmra.mxu0 %v257
    %v469 = vpop.f32.mrf.mxu0
    %v470 = vadd.f32 %v100, %v469
    %471 = vmatmul.f32.gmra.mxu0 %v260
    %v472 = vpop.f32.mrf.mxu0
    %v473 = vadd.f32 %v100, %v472
    %474 = vmatmul.f32.gmra.mxu0 %v263
    %v475 = vpop.f32.mrf.mxu0
    %v476 = vadd.f32 %v100, %v475
    %477 = vmatmul.f32.gmra.mxu0 %v266
    %v478 = vpop.f32.mrf.mxu0
    %v479 = vadd.f32 %v100, %v478
    %480 = vmatmul.f32.gmra.mxu0 %v269
    %v481 = vpop.f32.mrf.mxu0
    %v482 = vadd.f32 %v100, %v481
    %483 = vmatmul.f32.gmra.mxu0 %v272
    %v484 = vpop.f32.mrf.mxu0
    %v485 = vadd.f32 %v100, %v484
    %486 = vmatmul.f32.gmra.mxu0 %v275
    %v487 = vpop.f32.mrf.mxu0
    %v488 = vadd.f32 %v100, %v487
    %489 = vmatmul.f32.gmra.mxu0 %v278
    %v490 = vpop.f32.mrf.mxu0
    %v491 = vadd.f32 %v100, %v490
    %492 = vmatmul.f32.gmra.mxu0 %v281
    %v493 = vpop.f32.mrf.mxu0
    %v494 = vadd.f32 %v100, %v493
    %495 = vmatmul.f32.gmra.mxu0 %v284
    %v496 = vpop.f32.mrf.mxu0
    %v497 = vadd.f32 %v100, %v496
    %498 = vmatmul.f32.gmra.mxu0 %v287
    %v499 = vpop.f32.mrf.mxu0
    %v500 = vadd.f32 %v100, %v499
    %501 = vmatmul.f32.gmra.mxu0 %v290
    %v502 = vpop.f32.mrf.mxu0
    %v503 = vadd.f32 %v100, %v502
    %504 = vmatmul.f32.gmra.mxu0 %v293
    %v505 = vpop.f32.mrf.mxu0
    %v506 = vadd.f32 %v100, %v505
    %507 = vdwg.mxu0
    %v508 = vmax.f32 %v317, 0.0
    %v509 = vmax.f32 %v320, 0.0
    %v510 = vmax.f32 %v323, 0.0
    %v511 = vmax.f32 %v326, 0.0
    %v512 = vmax.f32 %v329, 0.0
    %v513 = vmax.f32 %v332, 0.0
    %v514 = vmax.f32 %v335, 0.0
    %v515 = vmax.f32 %v338, 0.0
    %v516 = vmax.f32 %v341, 0.0
    %v517 = vmax.f32 %v344, 0.0
    %v518 = vmax.f32 %v347, 0.0
    %v519 = vmax.f32 %v350, 0.0
    %v520 = vmax.f32 %v353, 0.0
    %v521 = vmax.f32 %v356, 0.0
    %v522 = vmax.f32 %v359, 0.0
    %v523 = vmax.f32 %v362, 0.0
    %v524 = vmax.f32 %v365, 0.0
    %v525 = vmax.f32 %v368, 0.0
    %v526 = vmax.f32 %v371, 0.0
    %v527 = vmax.f32 %v374, 0.0
    %v528 = vmax.f32 %v377, 0.0
    %v529 = vmax.f32 %v380, 0.0
    %v530 = vmax.f32 %v383, 0.0
    %v531 = vmax.f32 %v386, 0.0
    %v532 = vmax.f32 %v389, 0.0
    %v533 = vmax.f32 %v392, 0.0
    %v534 = vmax.f32 %v395, 0.0
    %v535 = vmax.f32 %v398, 0.0
    %v536 = vmax.f32 %v401, 0.0
    %v537 = vmax.f32 %v404, 0.0
    %v538 = vmax.f32 %v407, 0.0
    %v539 = vmax.f32 %v410, 0.0
    %v540 = vmax.f32 %v413, 0.0
    %v541 = vmax.f32 %v416, 0.0
    %v542 = vmax.f32 %v419, 0.0
    %v543 = vmax.f32 %v422, 0.0
    %v544 = vmax.f32 %v425, 0.0
    %v545 = vmax.f32 %v428, 0.0
    %v546 = vmax.f32 %v431, 0.0
    %v547 = vmax.f32 %v434, 0.0
    %v548 = vmax.f32 %v437, 0.0
    %v549 = vmax.f32 %v440, 0.0
    %v550 = vmax.f32 %v443, 0.0
    %v551 = vmax.f32 %v446, 0.0
    %v552 = vmax.f32 %v449, 0.0
    %v553 = vmax.f32 %v452, 0.0
    %v554 = vmax.f32 %v455, 0.0
    %v555 = vmax.f32 %v458, 0.0
    %v556 = vmax.f32 %v461, 0.0
    %v557 = vmax.f32 %v464, 0.0
    %v558 = vmax.f32 %v467, 0.0
    %v559 = vmax.f32 %v470, 0.0
    %v560 = vmax.f32 %v473, 0.0
    %v561 = vmax.f32 %v476, 0.0
    %v562 = vmax.f32 %v479, 0.0
    %v563 = vmax.f32 %v482, 0.0
    %v564 = vmax.f32 %v485, 0.0
    %v565 = vmax.f32 %v488, 0.0
    %v566 = vmax.f32 %v491, 0.0
    %v567 = vmax.f32 %v494, 0.0
    %v568 = vmax.f32 %v497, 0.0
    %v569 = vmax.f32 %v500, 0.0
    %v570 = vmax.f32 %v503, 0.0
    %v571 = vmax.f32 %v506, 0.0
    %v572 = vmax.f32 %v508, %v524
    %v573 = vmax.f32 %v509, %v525
    %v574 = vmax.f32 %v510, %v526
    %v575 = vmax.f32 %v511, %v527
    %v576 = vmax.f32 %v512, %v528
    %v577 = vmax.f32 %v513, %v529
    %v578 = vmax.f32 %v514, %v530
    %v579 = vmax.f32 %v515, %v531
    %v580 = vmax.f32 %v516, %v532
    %v581 = vmax.f32 %v517, %v533
    %v582 = vmax.f32 %v518, %v534
    %v583 = vmax.f32 %v519, %v535
    %v584 = vmax.f32 %v520, %v536
    %v585 = vmax.f32 %v521, %v537
    %v586 = vmax.f32 %v522, %v538
    %v587 = vmax.f32 %v523, %v539
    %v588 = vmax.f32 %v572, %v540
    %v589 = vmax.f32 %v573, %v541
    %v590 = vmax.f32 %v574, %v542
    %v591 = vmax.f32 %v575, %v543
    %v592 = vmax.f32 %v576, %v544
    %v593 = vmax.f32 %v577, %v545
    %v594 = vmax.f32 %v578, %v546
    %v595 = vmax.f32 %v579, %v547
    %v596 = vmax.f32 %v580, %v548
    %v597 = vmax.f32 %v581, %v549
    %v598 = vmax.f32 %v582, %v550
    %v599 = vmax.f32 %v583, %v551
    %v600 = vmax.f32 %v584, %v552
    %v601 = vmax.f32 %v585, %v553
    %v602 = vmax.f32 %v586, %v554
    %v603 = vmax.f32 %v587, %v555
    %v604 = vmax.f32 %v588, %v556
    %v605 = vmax.f32 %v589, %v557
    %v606 = vmax.f32 %v590, %v558
    %v607 = vmax.f32 %v591, %v559
    %v608 = vmax.f32 %v592, %v560
    %v609 = vmax.f32 %v593, %v561
    %v610 = vmax.f32 %v594, %v562
    %v611 = vmax.f32 %v595, %v563
    %v612 = vmax.f32 %v596, %v564
    %v613 = vmax.f32 %v597, %v565
    %v614 = vmax.f32 %v598, %v566
    %v615 = vmax.f32 %v599, %v567
    %v616 = vmax.f32 %v600, %v568
    %v617 = vmax.f32 %v601, %v569
    %v618 = vmax.f32 %v602, %v570
    %v619 = vmax.f32 %v603, %v571
    %v620 = vld [vmem:[%s3] sm:$0xff]
    %v621 = vld [vmem:[%s3 + $0x8] sm:$0x3]
    %v622 = vld [vmem:[%s4] sm:$0x1]
    %v624 = vperm.slane %v622, 0
    %vm626 = vcmask 80896
    %v628 = vsel %vm626, %v604, 0
    %v631 = vsel %vm626, %v605, 0
    %v634 = vsel %vm626, %v606, 0
    %v637 = vsel %vm626, %v607, 0
    %v640 = vsel %vm626, %v608, 0
    %v643 = vsel %vm626, %v609, 0
    %v646 = vsel %vm626, %v610, 0
    %v649 = vsel %vm626, %v611, 0
    %v652 = vsel %vm626, %v612, 0
    %v655 = vsel %vm626, %v613, 0
    %v658 = vsel %vm626, %v614, 0
    %v661 = vsel %vm626, %v615, 0
    %v664 = vsel %vm626, %v616, 0
    %v667 = vsel %vm626, %v617, 0
    %v670 = vsel %vm626, %v618, 0
    %v673 = vsel %vm626, %v619, 0
    %vm675 = vcmask 1041408
    %v677 = vsel %vm675, %v621, 0
    %679 = vmatpush.msra.mxu0 0.0
    %680 = vmatpush.msra.mxu0 0.0
    %681 = vmatpush.msra.mxu0 0.0
    %682 = vmatpush.msra.mxu0 0.0
    %683 = vmatpush.msra.mxu0 0.0
    %684 = vmatpush.msra.mxu0 0.0
    %685 = vmatpush.msra.mxu0 0.0
    %686 = vmatpush.msra.mxu0 0.0
    %687 = vmatpush.msra.mxu0 0.0
    %688 = vmatpush.msra.mxu0 0.0
    %689 = vmatpush.msra.mxu0 0.0
    %690 = vmatpush.msra.mxu0 0.0
    %691 = vmatpush.msra.mxu0 0.0
    %692 = vmatpush.msra.mxu0 0.0
    %693 = vmatpush.msra.mxu0 %v677
    %694 = vmatpush.msra.mxu0 %v620
    %695 = vmatmul.f32.gmra.mxu0 %v628
    %v696 = vpop.f32.mrf.mxu0
    %v697 = vadd.f32 %v624, %v696
    %698 = vmatmul.f32.gmra.mxu0 %v631
    %v699 = vpop.f32.mrf.mxu0
    %v700 = vadd.f32 %v624, %v699
    %701 = vmatmul.f32.gmra.mxu0 %v634
    %v702 = vpop.f32.mrf.mxu0
    %v703 = vadd.f32 %v624, %v702
    %704 = vmatmul.f32.gmra.mxu0 %v637
    %v705 = vpop.f32.mrf.mxu0
    %v706 = vadd.f32 %v624, %v705
    %707 = vmatmul.f32.gmra.mxu0 %v640
    %v708 = vpop.f32.mrf.mxu0
    %v709 = vadd.f32 %v624, %v708
    %710 = vmatmul.f32.gmra.mxu0 %v643
    %v711 = vpop.f32.mrf.mxu0
    %v712 = vadd.f32 %v624, %v711
    %713 = vmatmul.f32.gmra.mxu0 %v646
    %v714 = vpop.f32.mrf.mxu0
    %v715 = vadd.f32 %v624, %v714
    %716 = vmatmul.f32.gmra.mxu0 %v649
    %v717 = vpop.f32.mrf.mxu0
    %v718 = vadd.f32 %v624, %v717
    %719 = vmatmul.f32.gmra.mxu0 %v652
    %v720 = vpop.f32.mrf.mxu0
    %v721 = vadd.f32 %v624, %v720
    %722 = vmatmul.f32.gmra.mxu0 %v655
    %v723 = vpop.f32.mrf.mxu0
    %v724 = vadd.f32 %v624, %v723
    %725 = vmatmul.f32.gmra.mxu0 %v658
    %v726 = vpop.f32.mrf.mxu0
    %v727 = vadd.f32 %v624, %v726
    %728 = vmatmul.f32.gmra.mxu0 %v661
    %v729 = vpop.f32.mrf.mxu0
    %v730 = vadd.f32 %v624, %v729
    %731 = vmatmul.f32.gmra.mxu0 %v664
    %v732 = vpop.f32.mrf.mxu0
    %v733 = vadd.f32 %v624, %v732
    %734 = vmatmul.f32.gmra.mxu0 %v667
    %v735 = vpop.f32.mrf.mxu0
    %v736 = vadd.f32 %v624, %v735
    %737 = vmatmul.f32.gmra.mxu0 %v670
    %v738 = vpop.f32.mrf.mxu0
    %v739 = vadd.f32 %v624, %v738
    %740 = vmatmul.f32.gmra.mxu0 %v673
    %v741 = vpop.f32.mrf.mxu0
    %v742 = vadd.f32 %v624, %v741
    %743 = vdwg.mxu0
    %v744 = vmax.f32 %v697, 0.0
    %v745 = vmax.f32 %v700, 0.0
    %v746 = vmax.f32 %v703, 0.0
    %v747 = vmax.f32 %v706, 0.0
    %v748 = vmax.f32 %v709, 0.0
    %v749 = vmax.f32 %v712, 0.0
    %v750 = vmax.f32 %v715, 0.0
    %v751 = vmax.f32 %v718, 0.0
    %v752 = vmax.f32 %v721, 0.0
    %v753 = vmax.f32 %v724, 0.0
    %v754 = vmax.f32 %v727, 0.0
    %v755 = vmax.f32 %v730, 0.0
    %v756 = vmax.f32 %v733, 0.0
    %v757 = vmax.f32 %v736, 0.0
    %v758 = vmax.f32 %v739, 0.0
    %v759 = vmax.f32 %v742, 0.0
    %760 = vxpose.xlu0.b32.start [1/16] %v744, 128
    %761 = vxpose.xlu0.b32.cont [2/16] %v745, 128
    %762 = vxpose.xlu0.b32.cont [3/16] %v746, 128
    %763 = vxpose.xlu0.b32.cont [4/16] %v747, 128
    %764 = vxpose.xlu0.b32.cont [5/16] %v748, 128
    %765 = vxpose.xlu0.b32.cont [6/16] %v749, 128
    %766 = vxpose.xlu0.b32.cont [7/16] %v750, 128
    %767 = vxpose.xlu0.b32.cont [8/16] %v751, 128
    %768 = vxpose.xlu0.b32.cont [9/16] %v752, 128
    %769 = vxpose.xlu0.b32.cont [10/16] %v753, 128
    %770 = vxpose.xlu0.b32.cont [11/16] %v754, 128
    %771 = vxpose.xlu0.b32.cont [12/16] %v755, 128
    %772 = vxpose.xlu0.b32.cont [13/16] %v756, 128
    %773 = vxpose.xlu0.b32.cont [14/16] %v757, 128
    %774 = vxpose.xlu0.b32.cont [15/16] %v758, 128
    %775 = vxpose.xlu0.b32.end [16/16] %v759, 128
    %v776 = vpop.trf.xlu0
    %v777 = vpop.trf.xlu0
    %v778 = vpop.trf.xlu0
    %v779 = vpop.trf.xlu0
    %v780 = vpop.trf.xlu0
    %v781 = vpop.trf.xlu0
    %v782 = vpop.trf.xlu0
    %v783 = vpop.trf.xlu0
    %v784 = vpop.trf.xlu0
    %v785 = vpop.trf.xlu0
    %v786 = vpop.trf.xlu0
    %v787 = vpop.trf.xlu0
    %v788 = vpop.trf.xlu0
    %v789 = vpop.trf.xlu0
    %v790 = vpop.trf.xlu0
    %v791 = vpop.trf.xlu0
    %vm792 = vcmask 516096
    %793 = vst.msk [vmem:[#allocation2] sm:$0x1] %vm792, %v776
    %v795 = vrot.slane %v776, 7
    %v796 = vrot.slane %v795, 2
    %797 = vrot.lane.b32.xlu0 %v796, 64
    %v798 = vpop.permute.xlu0 %797
    %vm800 = vcmask 1040896
    %801 = vst.msk [vmem:[#allocation2] sm:$0x1] %vm800, %v798
    %802 = vst.sshfl [vmem:[#allocation1] sm:$0xff pattern:$0x73625140] %v776
    %s803 = scalar_lea.vmem [#allocation1], 1
    %v804 = vld [vmem:[%s803] ss:$4 sm:$0xff]
    %806 = vst.msk [vmem:[#allocation2 + $0x2] sm:$0x1] %vm792, %v804
    %807 = vst.sshfl [vmem:[#allocation1] sm:$0xff pattern:$0x73625140] %v776
    %s808 = scalar_lea.vmem [#allocation1], 1
    %v809 = vld [vmem:[%s808] ss:$4 sm:$0xff]
    %v810 = vrot.slane %v809, 7
    %v811 = vrot.slane %v810, 2
    %812 = vrot.lane.b32.xlu0 %v811, 64
    %v813 = vpop.permute.xlu0 %812
    %815 = vst.msk [vmem:[#allocation2 + $0x2] sm:$0x1] %vm800, %v813
    %816 = vst.sshfl [vmem:[#allocation1] sm:$0xff pattern:$0x73625140] %v776
    %s817 = scalar_lea.vmem [#allocation1], 2
    %v818 = vld [vmem:[%s817] ss:$4 sm:$0xff]
    %820 = vst.msk [vmem:[#allocation2 + $0x4] sm:$0x1] %vm792, %v818
    %821 = vst.sshfl [vmem:[#allocation1] sm:$0xff pattern:$0x73625140] %v776
    %s822 = scalar_lea.vmem [#allocation1], 2
    %v823 = vld [vmem:[%s822] ss:$4 sm:$0xff]
    %v824 = vrot.slane %v823, 7
    %v825 = vrot.slane %v824, 2
    %826 = vrot.lane.b32.xlu0 %v825, 64
    %v827 = vpop.permute.xlu0 %826
    %829 = vst.msk [vmem:[#allocation2 + $0x4] sm:$0x1] %vm800, %v827
    %830 = vst.sshfl [vmem:[#allocation1] sm:$0xff pattern:$0x73625140] %v776
    %s831 = scalar_lea.vmem [#allocation1], 3
    %v832 = vld [vmem:[%s831] ss:$4 sm:$0xff]
    %834 = vst.msk [vmem:[#allocation2 + $0x6] sm:$0x1] %vm792, %v832
    %835 = vst.sshfl [vmem:[#allocation1] sm:$0xff pattern:$0x73625140] %v776
    %s836 = scalar_lea.vmem [#allocation1], 3
    %v837 = vld [vmem:[%s836] ss:$4 sm:$0xff]
    %v838 = vrot.slane %v837, 7
    %v839 = vrot.slane %v838, 2
    %840 = vrot.lane.b32.xlu0 %v839, 64
    %v841 = vpop.permute.xlu0 %840
    %843 = vst.msk [vmem:[#allocation2 + $0x6] sm:$0x1] %vm800, %v841
    %844 = vst.msk [vmem:[#allocation2 + $0x8] sm:$0x1] %vm792, %v777
    %v846 = vrot.slane %v777, 7
    %v847 = vrot.slane %v846, 2
    %848 = vrot.lane.b32.xlu0 %v847, 64
    %v849 = vpop.permute.xlu0 %848
    %851 = vst.msk [vmem:[#allocation2 + $0x8] sm:$0x1] %vm800, %v849
    %852 = vrot.lane.b32.xlu0 %v776, 64
    %v853 = vpop.permute.xlu0 %852
    %855 = vst.msk [vmem:[#allocation2 + $0x1] sm:$0x1] %vm792, %v853
    %857 = vst.msk [vmem:[#allocation2 + $0x1] sm:$0x1] %vm800, %v796
    %858 = vst.sshfl [vmem:[#allocation1] sm:$0xff pattern:$0x73625140] %v776
    %s859 = scalar_lea.vmem [#allocation1], 1
    %v860 = vld [vmem:[%s859] ss:$4 sm:$0xff]
    %861 = vrot.lane.b32.xlu0 %v860, 64
    %v862 = vpop.permute.xlu0 %861
    %864 = vst.msk [vmem:[#allocation2 + $0x3] sm:$0x1] %vm792, %v862
    %865 = vst.sshfl [vmem:[#allocation1] sm:$0xff pattern:$0x73625140] %v776
    %s866 = scalar_lea.vmem [#allocation1], 1
    %v867 = vld [vmem:[%s866] ss:$4 sm:$0xff]
    %v868 = vrot.slane %v867, 7
    %v869 = vrot.slane %v868, 2
    %871 = vst.msk [vmem:[#allocation2 + $0x3] sm:$0x1] %vm800, %v869
    %872 = vst.sshfl [vmem:[#allocation1] sm:$0xff pattern:$0x73625140] %v776
    %s873 = scalar_lea.vmem [#allocation1], 2
    %v874 = vld [vmem:[%s873] ss:$4 sm:$0xff]
    %875 = vrot.lane.b32.xlu0 %v874, 64
    %v876 = vpop.permute.xlu0 %875
    %878 = vst.msk [vmem:[#allocation2 + $0x5] sm:$0x1] %vm792, %v876
    %879 = vst.sshfl [vmem:[#allocation1] sm:$0xff pattern:$0x73625140] %v776
    %s880 = scalar_lea.vmem [#allocation1], 2
    %v881 = vld [vmem:[%s880] ss:$4 sm:$0xff]
    %v882 = vrot.slane %v881, 7
    %v883 = vrot.slane %v882, 2
    %885 = vst.msk [vmem:[#allocation2 + $0x5] sm:$0x1] %vm800, %v883
    %886 = vst.sshfl [vmem:[#allocation1] sm:$0xff pattern:$0x73625140] %v776
    %s887 = scalar_lea.vmem [#allocation1], 3
    %v888 = vld [vmem:[%s887] ss:$4 sm:$0xff]
    %889 = vrot.lane.b32.xlu0 %v888, 64
    %v890 = vpop.permute.xlu0 %889
    %892 = vst.msk [vmem:[#allocation2 + $0x7] sm:$0x1] %vm792, %v890
    %893 = vst.sshfl [vmem:[#allocation1] sm:$0xff pattern:$0x73625140] %v776
    %s894 = scalar_lea.vmem [#allocation1], 3
    %v895 = vld [vmem:[%s894] ss:$4 sm:$0xff]
    %v896 = vrot.slane %v895, 7
    %v897 = vrot.slane %v896, 2
    %899 = vst.msk [vmem:[#allocation2 + $0x7] sm:$0x1] %vm800, %v897
    %900 = vrot.lane.b32.xlu0 %v777, 64
    %v901 = vpop.permute.xlu0 %900
    %903 = vst.msk [vmem:[#allocation2 + $0x9] sm:$0x1] %vm792, %v901
    %905 = vst.msk [vmem:[#allocation2 + $0x9] sm:$0x1] %vm800, %v847
    %v906 = vld [vmem:[#allocation2] sm:$0xff]
    %v907 = vld [vmem:[#allocation2 + $0x8] sm:$0x3]
    %v908 = vld [vmem:[%s5] sm:$0xff]
    %v909 = vld [vmem:[%s5 + $0x8] sm:$0xff]
    %v910 = vld [vmem:[%s5 + $0x10] sm:$0xff]
    %v911 = vld [vmem:[%s5 + $0x18] sm:$0xff]
    %v912 = vld [vmem:[%s5 + $0x20] sm:$0xff]
    %v913 = vld [vmem:[%s5 + $0x28] sm:$0xff]
    %v914 = vld [vmem:[%s5 + $0x30] sm:$0xff]
    %v915 = vld [vmem:[%s5 + $0x38] sm:$0xff]
    %v916 = vld [vmem:[%s5 + $0x40] sm:$0xff]
    %v917 = vld [vmem:[%s5 + $0x48] sm:$0xff]
    %v918 = vld [vmem:[%s5 + $0x50] sm:$0xff]
    %v919 = vld [vmem:[%s5 + $0x58] sm:$0xff]
    %v920 = vld [vmem:[%s5 + $0x60] sm:$0xff]
    %v921 = vld [vmem:[%s5 + $0x68] sm:$0xff]
    %v922 = vld [vmem:[%s5 + $0x70] sm:$0xff]
    %v923 = vld [vmem:[%s5 + $0x78] sm:$0xff]
    %v924 = vld [vmem:[%s5 + $0x80] sm:$0xff]
    %v925 = vld [vmem:[%s5 + $0x88] sm:$0xff]
    %v926 = vld [vmem:[%s5 + $0x90] sm:$0xff]
    %v927 = vld [vmem:[%s5 + $0x98] sm:$0xff]
    %v928 = vld [vmem:[%s5 + $0xa0] sm:$0xff]
    %v929 = vld [vmem:[%s5 + $0xa8] sm:$0xff]
    %v930 = vld [vmem:[%s5 + $0xb0] sm:$0xff]
    %v931 = vld [vmem:[%s5 + $0xb8] sm:$0xff]
    %v932 = vld [vmem:[%s5 + $0xc0] sm:$0xff]
    %v933 = vld [vmem:[%s5 + $0xc8] sm:$0xff]
    %v934 = vld [vmem:[%s5 + $0xd0] sm:$0xff]
    %v935 = vld [vmem:[%s5 + $0xd8] sm:$0xff]
    %v936 = vld [vmem:[%s5 + $0xe0] sm:$0xff]
    %v937 = vld [vmem:[%s5 + $0xe8] sm:$0xff]
    %v938 = vld [vmem:[%s5 + $0xf0] sm:$0xff]
    %v939 = vld [vmem:[%s5 + $0xf8] sm:$0xff]
    %v940 = vld [vmem:[%s5 + $0x100] sm:$0xff]
    %v941 = vld [vmem:[%s5 + $0x108] sm:$0xff]
    %v942 = vld [vmem:[%s5 + $0x110] sm:$0xff]
    %v943 = vld [vmem:[%s5 + $0x118] sm:$0xff]
    %v944 = vld [vmem:[%s5 + $0x120] sm:$0xff]
    %v945 = vld [vmem:[%s5 + $0x128] sm:$0xff]
    %v946 = vld [vmem:[%s5 + $0x130] sm:$0xff]
    %v947 = vld [vmem:[%s5 + $0x138] sm:$0xff]
    %v948 = vld [vmem:[%s5 + $0x140] sm:$0xff]
    %v949 = vld [vmem:[%s5 + $0x148] sm:$0xff]
    %v950 = vld [vmem:[%s5 + $0x150] sm:$0xff]
    %v951 = vld [vmem:[%s5 + $0x158] sm:$0xff]
    %v952 = vld [vmem:[%s5 + $0x160] sm:$0xff]
    %v953 = vld [vmem:[%s5 + $0x168] sm:$0xff]
    %v954 = vld [vmem:[%s5 + $0x170] sm:$0xff]
    %v955 = vld [vmem:[%s5 + $0x178] sm:$0xff]
    %v956 = vld [vmem:[%s5 + $0x180] sm:$0xff]
    %v957 = vld [vmem:[%s5 + $0x188] sm:$0xff]
    %v958 = vld [vmem:[%s5 + $0x190] sm:$0xff]
    %v959 = vld [vmem:[%s5 + $0x198] sm:$0xff]
    %v960 = vld [vmem:[%s5 + $0x1a0] sm:$0xff]
    %v961 = vld [vmem:[%s5 + $0x1a8] sm:$0xff]
    %v962 = vld [vmem:[%s5 + $0x1b0] sm:$0xff]
    %v963 = vld [vmem:[%s5 + $0x1b8] sm:$0xff]
    %v964 = vld [vmem:[%s5 + $0x1c0] sm:$0xff]
    %v965 = vld [vmem:[%s5 + $0x1c8] sm:$0xff]
    %v966 = vld [vmem:[%s5 + $0x1d0] sm:$0xff]
    %v967 = vld [vmem:[%s5 + $0x1d8] sm:$0xff]
    %v968 = vld [vmem:[%s5 + $0x1e0] sm:$0xff]
    %v969 = vld [vmem:[%s5 + $0x1e8] sm:$0xff]
    %v970 = vld [vmem:[%s5 + $0x1f0] sm:$0xff]
    %v971 = vld [vmem:[%s5 + $0x1f8] sm:$0xff]
    %v972 = vld [vmem:[%s5 + $0x200] sm:$0xff]
    %v973 = vld [vmem:[%s5 + $0x208] sm:$0xff]
    %v974 = vld [vmem:[%s5 + $0x210] sm:$0xff]
    %v975 = vld [vmem:[%s5 + $0x218] sm:$0xff]
    %v976 = vld [vmem:[%s5 + $0x220] sm:$0xff]
    %v977 = vld [vmem:[%s5 + $0x228] sm:$0xff]
    %v978 = vld [vmem:[%s5 + $0x230] sm:$0xff]
    %v979 = vld [vmem:[%s5 + $0x238] sm:$0xff]
    %v980 = vld [vmem:[%s5 + $0x240] sm:$0xff]
    %v981 = vld [vmem:[%s5 + $0x248] sm:$0xff]
    %v982 = vld [vmem:[%s5 + $0x250] sm:$0xff]
    %v983 = vld [vmem:[%s5 + $0x258] sm:$0xff]
    %v984 = vld [vmem:[%s5 + $0x260] sm:$0xff]
    %v985 = vld [vmem:[%s5 + $0x268] sm:$0xff]
    %v986 = vld [vmem:[%s5 + $0x270] sm:$0xff]
    %v987 = vld [vmem:[%s5 + $0x278] sm:$0xff]
    %v988 = vld [vmem:[%s6] sm:$0x1]
    %v990 = vperm.slane %v988, 0
    %994 = vst [vmem:[#allocation1] ss:$4 sm:$0xff] %v906
    %s995 = scalar_lea.vmem [#allocation1], 32
    %996 = vst [vmem:[%s995] ss:$4 sm:$0xff] %v907
    %v997 = vld.sshfl [vmem:[#allocation1] sm:$0xff pattern:$0x73625140]
    %v998 = vld.sshfl [vmem:[#allocation1 + $0x8] sm:$0xff pattern:$0x73625140]
    %v999 = vld.sshfl [vmem:[#allocation1 + $0x10] sm:$0xff pattern:$0x73625140]
    %v1000 = vld.sshfl [vmem:[#allocation1 + $0x18] sm:$0xff pattern:$0x73625140]
    %v1001 = vld.sshfl [vmem:[#allocation1 + $0x20] sm:$0xff pattern:$0x73625140]
    %1007 = vmatpush.msra.mxu0 %v923
    %1008 = vmatpush.msra.mxu0 %v922
    %1009 = vmatpush.msra.mxu0 %v921
    %1010 = vmatpush.msra.mxu0 %v920
    %1011 = vmatpush.msra.mxu0 %v919
    %1012 = vmatpush.msra.mxu0 %v918
    %1013 = vmatpush.msra.mxu0 %v917
    %1014 = vmatpush.msra.mxu0 %v916
    %1015 = vmatpush.msra.mxu0 %v915
    %1016 = vmatpush.msra.mxu0 %v914
    %1017 = vmatpush.msra.mxu0 %v913
    %1018 = vmatpush.msra.mxu0 %v912
    %1019 = vmatpush.msra.mxu0 %v911
    %1020 = vmatpush.msra.mxu0 %v910
    %1021 = vmatpush.msra.mxu0 %v909
    %1022 = vmatpush.msra.mxu0 %v908
    %1023 = vmatmul.f32.gmra.mxu0 %v997
    %v1024 = vpop.f32.mrf.mxu0
    %v1025 = vadd.f32 %v990, %v1024
    %1026 = vdwg.mxu0
    %1027 = vmatpush.msra.mxu0 %v939
    %1028 = vmatpush.msra.mxu0 %v938
    %1029 = vmatpush.msra.mxu0 %v937
    %1030 = vmatpush.msra.mxu0 %v936
    %1031 = vmatpush.msra.mxu0 %v935
    %1032 = vmatpush.msra.mxu0 %v934
    %1033 = vmatpush.msra.mxu0 %v933
    %1034 = vmatpush.msra.mxu0 %v932
    %1035 = vmatpush.msra.mxu0 %v931
    %1036 = vmatpush.msra.mxu0 %v930
    %1037 = vmatpush.msra.mxu0 %v929
    %1038 = vmatpush.msra.mxu0 %v928
    %1039 = vmatpush.msra.mxu0 %v927
    %1040 = vmatpush.msra.mxu0 %v926
    %1041 = vmatpush.msra.mxu0 %v925
    %1042 = vmatpush.msra.mxu0 %v924
    %1043 = vmatmul.f32.gmra.mxu0 %v998
    %v1044 = vpop.f32.mrf.mxu0
    %v1045 = vadd.f32 %v1025, %v1044
    %1046 = vdwg.mxu0
    %1047 = vmatpush.msra.mxu0 %v955
    %1048 = vmatpush.msra.mxu0 %v954
    %1049 = vmatpush.msra.mxu0 %v953
    %1050 = vmatpush.msra.mxu0 %v952
    %1051 = vmatpush.msra.mxu0 %v951
    %1052 = vmatpush.msra.mxu0 %v950
    %1053 = vmatpush.msra.mxu0 %v949
    %1054 = vmatpush.msra.mxu0 %v948
    %1055 = vmatpush.msra.mxu0 %v947
    %1056 = vmatpush.msra.mxu0 %v946
    %1057 = vmatpush.msra.mxu0 %v945
    %1058 = vmatpush.msra.mxu0 %v944
    %1059 = vmatpush.msra.mxu0 %v943
    %1060 = vmatpush.msra.mxu0 %v942
    %1061 = vmatpush.msra.mxu0 %v941
    %1062 = vmatpush.msra.mxu0 %v940
    %1063 = vmatmul.f32.gmra.mxu0 %v999
    %v1064 = vpop.f32.mrf.mxu0
    %v1065 = vadd.f32 %v1045, %v1064
    %1066 = vdwg.mxu0
    %1067 = vmatpush.msra.mxu0 %v971
    %1068 = vmatpush.msra.mxu0 %v970
    %1069 = vmatpush.msra.mxu0 %v969
    %1070 = vmatpush.msra.mxu0 %v968
    %1071 = vmatpush.msra.mxu0 %v967
    %1072 = vmatpush.msra.mxu0 %v966
    %1073 = vmatpush.msra.mxu0 %v965
    %1074 = vmatpush.msra.mxu0 %v964
    %1075 = vmatpush.msra.mxu0 %v963
    %1076 = vmatpush.msra.mxu0 %v962
    %1077 = vmatpush.msra.mxu0 %v961
    %1078 = vmatpush.msra.mxu0 %v960
    %1079 = vmatpush.msra.mxu0 %v959
    %1080 = vmatpush.msra.mxu0 %v958
    %1081 = vmatpush.msra.mxu0 %v957
    %1082 = vmatpush.msra.mxu0 %v956
    %1083 = vmatmul.f32.gmra.mxu0 %v1000
    %v1084 = vpop.f32.mrf.mxu0
    %v1085 = vadd.f32 %v1065, %v1084
    %1086 = vdwg.mxu0
    %1087 = vmatpush.msra.mxu0 %v987
    %1088 = vmatpush.msra.mxu0 %v986
    %1089 = vmatpush.msra.mxu0 %v985
    %1090 = vmatpush.msra.mxu0 %v984
    %1091 = vmatpush.msra.mxu0 %v983
    %1092 = vmatpush.msra.mxu0 %v982
    %1093 = vmatpush.msra.mxu0 %v981
    %1094 = vmatpush.msra.mxu0 %v980
    %1095 = vmatpush.msra.mxu0 %v979
    %1096 = vmatpush.msra.mxu0 %v978
    %1097 = vmatpush.msra.mxu0 %v977
    %1098 = vmatpush.msra.mxu0 %v976
    %1099 = vmatpush.msra.mxu0 %v975
    %1100 = vmatpush.msra.mxu0 %v974
    %1101 = vmatpush.msra.mxu0 %v973
    %1102 = vmatpush.msra.mxu0 %v972
    %1103 = vmatmul.f32.gmra.mxu0 %v1001
    %v1104 = vpop.f32.mrf.mxu0
    %v1105 = vadd.f32 %v1085, %v1104
    %1106 = vdwg.mxu0
    %v1107 = vmax.f32 %v1105, 0.0
    %v1108 = vld [vmem:[%s7] sm:$0xff]
    %v1109 = vld [vmem:[%s7 + $0x8] sm:$0xff]
    %v1110 = vld [vmem:[%s7 + $0x10] sm:$0xff]
    %v1111 = vld [vmem:[%s7 + $0x18] sm:$0xff]
    %v1112 = vld [vmem:[%s7 + $0x20] sm:$0xff]
    %v1113 = vld [vmem:[%s7 + $0x28] sm:$0xff]
    %v1114 = vld [vmem:[%s7 + $0x30] sm:$0xff]
    %v1115 = vld [vmem:[%s7 + $0x38] sm:$0xff]
    %v1116 = vld [vmem:[%s7 + $0x40] sm:$0xff]
    %v1117 = vld [vmem:[%s7 + $0x48] sm:$0xff]
    %v1118 = vld [vmem:[%s7 + $0x50] sm:$0xff]
    %v1119 = vld [vmem:[%s7 + $0x58] sm:$0xff]
    %v1120 = vld [vmem:[%s7 + $0x60] sm:$0xf]
    %v1121 = vld [vmem:[%s8] sm:$0x1]
    %v1123 = vperm.slane %v1121, 0
    %vm1125 = vcmask 818176
    %v1127 = vsel %vm1125, %v1107, 0
    %v1130 = vsel %vm295, %v1120, 0
    %1132 = vmatpush.msra.mxu0 0.0
    %1133 = vmatpush.msra.mxu0 0.0
    %1134 = vmatpush.msra.mxu0 0.0
    %1135 = vmatpush.msra.mxu0 %v1130
    %1136 = vmatpush.msra.mxu0 %v1119
    %1137 = vmatpush.msra.mxu0 %v1118
    %1138 = vmatpush.msra.mxu0 %v1117
    %1139 = vmatpush.msra.mxu0 %v1116
    %1140 = vmatpush.msra.mxu0 %v1115
    %1141 = vmatpush.msra.mxu0 %v1114
    %1142 = vmatpush.msra.mxu0 %v1113
    %1143 = vmatpush.msra.mxu0 %v1112
    %1144 = vmatpush.msra.mxu0 %v1111
    %1145 = vmatpush.msra.mxu0 %v1110
    %1146 = vmatpush.msra.mxu0 %v1109
    %1147 = vmatpush.msra.mxu0 %v1108
    %1148 = vmatmul.f32.gmra.mxu0 %v1127
    %v1149 = vpop.f32.mrf.mxu0
    %v1150 = vadd.f32 %v1123, %v1149
    %1151 = vdwg.mxu0
    %vm1152 = vcmask 9216
    %v1153 = vsel %vm1152, %v1150, -inf
    %1154 = vmax.xlane.f32.xlu0 %v1153
    %v1155 = vpop.xlane.xlu0 %1154
    %v1156 = vsub.f32 %v1150, %v1155
    %v1157 = vmul.f32 %v1156, 1.442695
    %v1158 = vpow.pop %v1157
    %v1159 = vsel %vm1152, %v1158, 0.0
    %1160 = vadd.xlane.f32.xlu0 %v1159
    %v1161 = vpop.xlane.xlu0 %1160
    %v1162 = vrcp.pop %v1161
    %v1163 = vmul.f32 %v1161, %v1162
    %v1164 = vsub.f32 1.0, %v1163
    %v1165 = vmul.f32 %v1162, %v1164
    %v1166 = vadd.f32 %v1162, %v1165
    %vm1167 = vweird.f32 %v1161
    %vm1168 = vweird.f32 %v1162
    %vm1169 = vmor %vm1167, %vm1168
    %v1170 = vsel %vm1169, %v1162, %v1166
    %v1171 = vand.u32 2147483647, %v1161
    %vm1172 = vcmp.eq.f32.partialorder %v1171, 8.507059e+37
    %v1173 = vand.u32 %v1161, 2147483648
    %v1174 = vor.u32 1.1754944e-38, %v1173
    %v1175 = vsel %vm1172, %v1174, %v1170
    %v1176 = vmul.f32 %v1158, %v1175
    %1177 = vst.msk [vmem:[#allocation3] sm:$0x3] %vm1152, %v1176
    // Predicated region
    $region38: #{cnn2d_forward.1} parent=1 // pred_check
      _
    $region39: #{cnn2d_forward.1} parent=1 // pred_check_branch
      %1179 = sbr.rel (0) target = $region41
    $region40: #{cnn2d_forward.1} parent=1 // pred_region
      %1181 = vsyncadd [#allocation4], 0
      %s1183 = sshll.u32 [#allocation3], 4
      %s1184 = int_to_ptr.vmem [resolvable:$true] %s1183
      %s1185 = sshll.u32 %s9, 4
      %s1186 = int_to_ptr.hbm [resolvable:$true] %s1185
      %1188 = dma.vmem_to_hbm [thread:$0]  %s1184, 32, %s1186, [#allocation4]
    $region41: #{cnn2d_forward.1} parent=1 // pred_fallthru
      _
    // Predicated region
    $region42: #{cnn2d_forward.1} parent=1 // pred_check
      _
    $region43: #{cnn2d_forward.1} parent=1 // pred_check_branch
      %1190 = sbr.rel (0) target = $region45
    $region44: #{cnn2d_forward.1} parent=1 // pred_region
      %1192 = dma.done [#allocation4], 32
    $region45: #{cnn2d_forward.1} parent=1 // pred_fallthru
      _
    %1193 = vsyncpa [#allocation4], 1

</llo_original>
